<compile_context>
chip_gen: v6e
topology: v6e:2x2x1
jax: 0.10.0
libtpu: 0.0.40
codegen_flags: <defaults>
</compile_context>

<pallas_src>
import jax
import jax.numpy as jnp
from jax.experimental import pallas as pl
from jax.experimental.pallas import tpu as pltpu


def _dma_flatten_kernel(x_ref, o_ref, sem):
    # Single whole-buffer HBM->HBM DMA; no grid, no VMEM staging.
    cp = pltpu.make_async_copy(x_ref, o_ref, sem)
    cp.start()
    cp.wait()


def flatten(x):
    """Equivalent of torch Flatten().forward(x): x.view(x.size(0), -1)."""
    n = x.shape[0]
    f = 1
    for d in x.shape[1:]:
        f *= d
    total = n * f
    if total == 0:
        return x.reshape(n, f)  # nothing to copy

    itemsize = jnp.dtype(x.dtype).itemsize

    # Metadata-only row-major reshape outside the kernel; element order is
    # exactly torch's x.view(x.size(0), -1) (same dtype, same order).
    x2 = x.reshape(n, f)

    return pl.pallas_call(
        _dma_flatten_kernel,
        out_shape=jax.ShapeDtypeStruct((n, f), x.dtype),
        in_specs=[pl.BlockSpec(memory_space=pl.ANY)],
        out_specs=pl.BlockSpec(memory_space=pl.ANY),
        scratch_shapes=[pltpu.SemaphoreType.DMA],
        cost_estimate=pl.CostEstimate(
            flops=0,
            transcendentals=0,
            bytes_accessed=2 * total * itemsize,
        ),
    )(x2)


if __name__ == "__main__":
    key = jax.random.PRNGKey(0)

    # Small NCHW input consistent with the module's usage after conv blocks.
    x = jax.random.normal(key, (2, 4, 16, 16), dtype=jnp.float32)
    y = jax.block_until_ready(flatten(x))
    ref = x.reshape(x.shape[0], -1)
    assert y.shape == ref.shape, (y.shape, ref.shape)
    assert y.dtype == ref.dtype
    assert bool(jnp.all(y == ref))

    # Larger multi-MiB case: still a single full-bandwidth DMA.
    x_big = jax.random.normal(key, (16, 64, 32, 32), dtype=jnp.float32)
    y_big = jax.block_until_ready(flatten(x_big))
    assert bool(jnp.all(y_big == x_big.reshape(16, -1)))

    # Ragged shape + sub-32-bit dtype: whole-buffer DMA is shape/dtype
    # agnostic (no tiling, no masked tail, no sublane packing concerns).
    x_bf = jax.random.normal(key, (3, 5, 7, 9), dtype=jnp.bfloat16)
    y_bf = jax.block_until_ready(flatten(x_bf))
    assert y_bf.shape == (3, 5 * 7 * 9)
    assert y_bf.dtype == jnp.bfloat16
    assert bool(jnp.all(y_bf == x_bf.reshape(3, -1)))

    print("KERNEL_OK")
</pallas_src>

<mosaic_0001>
module attributes {stable_mosaic.version = 11 : i64} {
  func.func @_dma_flatten_kernel(%arg0: memref<2x1024xf32, #tpu.memory_space<any>>, %arg1: memref<2x1024xf32, #tpu.memory_space<any>>, %arg2: memref<!tpu.dma_semaphore, #tpu.memory_space<semaphore_mem>>) attributes {dimension_semantics = [], scalar_prefetch = 0 : i64, scratch_operands = 1 : i64, tpu.core_type = #tpu.core_type<tc>} {
    tpu.enqueue_dma source(%arg0 : memref<2x1024xf32, #tpu.memory_space<any>>) target(%arg1 : memref<2x1024xf32, #tpu.memory_space<any>>) target_semaphore(%arg2 : memref<!tpu.dma_semaphore, #tpu.memory_space<semaphore_mem>>)
    tpu.wait_dma2 semaphore(%arg2 : memref<!tpu.dma_semaphore, #tpu.memory_space<semaphore_mem>>) src(%arg0 : memref<2x1024xf32, #tpu.memory_space<any>>) dst(%arg1 : memref<2x1024xf32, #tpu.memory_space<any>>)
    return
  }
}

</mosaic_0001>

<llo_original>
// kernel: tpu_custom_call.1
$region0: #{tpu_custom_call.1}
  #allocation0 [shape = 'u32[]', space=smem, size = 0x4, offset = 0x4, fixed_abs, tag = 'smem constant byte address 0x4 - core index']
  #allocation1 [shape = 'u32[144,128]{1,0:T(1,128)}', space=vmem, size = 0x12000, scoped, tag = 'internal scratch']
  #allocation2 [shape = 's32[1]{0}', space=sflag, size = 0x4, scoped, tag = 'scratch operand']
  #allocation3 [shape = 's32[]', space=sflag, size = 0x4, offset = 0, fixed_abs, tag = 'sflag constant byte address 0x0 - dummy sync flag']
  #allocation4 [shape = 'u32[0]{0}', space=smem, size = 0, offset = 0, fixed_abs, tag = 'smem constant byte address 0x0 - null']
  %s0 = inlined_call_operand.hbm [shape: f32[2,1024], index: 0, kind: input, shape index: {}]
  %s1 = inlined_call_operand.hbm [shape: f32[2,1024], index: 1, kind: output, shape index: {}]
  %s2 = sld [smem:[#allocation0]]
  $region2: #{tpu_custom_call.1} parent=0
    _
  %s4 = ssub.s32 1, %s2
  %s5 = scalar_select 0, %s4, %s2
  %s7 = sshll.u32 1, 14
  %s8 = sxor.u32 4294967295, %s7
  %12 = dma.general %s0, 256, %s1, [#allocation2], 131072, [#allocation4], 0, 0
  %s13 = smul.u32 2, 1
  %s14 = smul.u32 %s13, 8
  %s15 = sshll.u32 %s14, 4
  %16 = dma.done [#allocation2], %s15
  %17 = vsyncmov [#allocation2]
  %s18 = vpop.sfrf %17
  %p19 = scmp.eq.s32.totalorder %s18, 0
  %p20 = pneg %p19
  %22 = shalt.err (%p20)

</llo_original>
